<compile_context>
chip_gen: v7x
topology: tpu7x:2x2x1
jax: 0.10.0
libtpu: 0.0.40
codegen_flags: <defaults>
</compile_context>

<pallas_src>
import math

import jax
import jax.numpy as jnp
from jax.experimental import pallas as pl
from jax.experimental.pallas import tpu as pltpu


def _attention_mechanism_kernel(x_ref, w1_ref, w2_ref, b_ref, o_ref):
    bt, l, d = x_ref.shape
    cd = w1_ref.dtype          # MXU operand dtype (bf16 by default); f32 accumulate

    # Collapse (Bt, L, D) -> (Bt*L, D) so the MXU sees a wide M dimension.
    # This reshape is layout-free when L is a multiple of the sublane pack
    # (8 for f32, 16 for bf16), which holds for the shapes used here.
    # TODO(synk): for sublane-unaligned L, switch to a 3-D lax.dot_general
    #             ('bld,de->ble') to avoid a potential VMEM relayout copy.
    x = x_ref[...].astype(cd).reshape(bt * l, d)

    b1 = b_ref[0:1, :].astype(jnp.float32)                  # (1, D)
    b2 = b_ref[1:2, :].astype(jnp.float32)                  # (1, D)

    # Linear1 -> ReLU -> Linear2 (bf16 operands, f32 accumulation).
    h = jnp.dot(x, w1_ref[...], preferred_element_type=jnp.float32) + b1
    h = jnp.maximum(h, 0.0)
    z = jnp.dot(h.astype(cd), w2_ref[...],
                preferred_element_type=jnp.float32) + b2

    # Softmax over axis 1 (tokens) == nn.Softmax(dim=1) for 3-D input.
    # Each (batch, d) column is independent, so batch tiling / padded partial
    # batch blocks never contaminate valid rows.
    z = z.reshape(bt, l, d)
    z = z - jnp.max(z, axis=1, keepdims=True)
    p = jnp.exp(z)
    denom = jnp.sum(p, axis=1, keepdims=True)
    o_ref[...] = (p * pl.reciprocal(denom, approx=True)).astype(o_ref.dtype)


def _num_tensorcores_per_chip():
    """v7x exposes 2 TensorCores per chip; v5e / v6e have 1."""
    try:
        kind = jax.devices()[0].device_kind.lower()
    except Exception:  # defensive: never fail the wrapper over a HW query
        return 1
    return 2 if "v7" in kind else 1


def attention_mechanism(x, params, *, block_batch=None, target_rows=2048,
                        compute_dtype=jnp.bfloat16):
    """Pallas implementation of AttentionMechanism.forward for 3-D input."""
    # TODO(synk): nn.Softmax(dim=1) is rank-agnostic in the PyTorch module; this
    #             wrapper implements the 3-D (batch, tokens, embed_dim) case.
    w1, b1, w2, b2 = params
    assert x.ndim == 3, "expected (batch, tokens, embed_dim)"
    B, L, D = x.shape
    assert w1.shape == (D, D) and w2.shape == (D, D), (w1.shape, w2.shape)

    # MXU operands in bf16 (set compute_dtype=None for a pure-f32 matmul path).
    if compute_dtype is not None:
        w1 = w1.astype(compute_dtype)
        w2 = w2.astype(compute_dtype)

    # Pack both bias vectors into one (2, D) operand (fewer tiny padded vregs);
    # they are consumed in f32 inside the kernel.
    b_packed = jnp.stack([b1.reshape(-1), b2.reshape(-1)], axis=0).astype(jnp.float32)

    # ---- Tile / grid derivation (HBM-bound: biggest tile that fits wins) ----
    if block_batch is None:
        bt = min(B, max(1, target_rows // max(L, 1)))        # ~target_rows MXU rows/step
        ncores = _num_tensorcores_per_chip()
        if ncores > 1 and B > 1:
            # Split across the 2 TensorCores (v7x) only if each per-core tile
            # still feeds >= 512 MXU rows; nblk then divides evenly by ncores.
            per_core = pl.cdiv(B, ncores)
            if per_core < bt and per_core * L >= 512:
                bt = per_core
        # On single-TC chips (v5e/v6e) the grid is a sequential loop: never
        # shrink the tile just to create extra steps.
        # TODO(synk): for tiny-B / huge-L,D workloads on v7x, add a second
        #             'parallel' grid axis over W2's output columns instead.
    else:
        bt = max(1, min(block_batch, B))
    nblk = pl.cdiv(B, bt)

    # ---- VMEM budget (explicit limit only when the default could be tight) --
    in_isz = jnp.dtype(x.dtype).itemsize
    w_isz = jnp.dtype(w1.dtype).itemsize
    tile_elems = bt * L * D
    vmem_need = (
        2 * 2 * tile_elems * in_isz      # x + out tiles, double-buffered
        + 2 * 2 * D * D * w_isz          # W1 + W2 resident (2 buffers each)
        + 2 * 2 * D * 4                  # packed biases
        + 6 * tile_elems * 4             # f32 body temporaries (h, z, p, ...)
    )
    vmem_limit = None
    if vmem_need > (16 << 20):           # v5e's scoped-VMEM default is 16 MiB
        vmem_limit = min(int(vmem_need * 5 // 4), 48 << 20)   # headroom, < v7x 64 MiB

    # ---- Advisory cost estimate so XLA schedules/overlaps the call well -----
    cost = pl.CostEstimate(
        flops=4 * B * L * D * D,                           # two DxD matmuls
        transcendentals=B * L * D,                         # softmax exp
        bytes_accessed=2 * B * L * D * in_isz + 2 * D * D * w_isz + 2 * D * 4,
    )

    grid_spec = pltpu.PrefetchScalarGridSpec(
        num_scalar_prefetch=0,
        grid=(nblk,),
        in_specs=[
            pl.BlockSpec((bt, L, D), lambda i: (i, 0, 0)),   # x tile
            pl.BlockSpec((D, D), lambda i: (0, 0)),          # W1 (resident)
            pl.BlockSpec((D, D), lambda i: (0, 0)),          # W2 (resident)
            pl.BlockSpec((2, D), lambda i: (0, 0)),          # packed biases
        ],
        out_specs=pl.BlockSpec((bt, L, D), lambda i: (i, 0, 0)),
    )

    return pl.pallas_call(
        _attention_mechanism_kernel,
        out_shape=jax.ShapeDtypeStruct((B, L, D), x.dtype),
        grid_spec=grid_spec,
        compiler_params=pltpu.CompilerParams(
            dimension_semantics=("parallel",),
            vmem_limit_bytes=vmem_limit),
        cost_estimate=cost,
    )(x, w1, w2, b_packed)


def reference(x, params):
    """Pure-JAX (f32) reference for correctness check."""
    w1, b1, w2, b2 = params
    h = jax.nn.relu(x @ w1 + b1)
    z = h @ w2 + b2
    return jax.nn.softmax(z, axis=1)


if __name__ == "__main__":
    # Small, module-consistent config: opt.embed_dim = 128; input is a batch of
    # token sets (batch=4, tokens=16, embed_dim=128).
    batch, tokens, embed_dim = 4, 16, 128

    key = jax.random.PRNGKey(0)
    keys = jax.random.split(key, 3)

    x = jax.random.normal(keys[0], (batch, tokens, embed_dim), jnp.float32)

    def init_lin(k, fan_in, fan_out):
        # deterministic, torch.nn.Linear-like uniform init
        bound = 1.0 / math.sqrt(fan_in)
        k1, k2 = jax.random.split(k)
        w = jax.random.uniform(k1, (fan_in, fan_out), jnp.float32, -bound, bound)
        b = jax.random.uniform(k2, (fan_out,), jnp.float32, -bound, bound)
        return w, b

    w1, b1 = init_lin(keys[1], embed_dim, embed_dim)
    w2, b2 = init_lin(keys[2], embed_dim, embed_dim)
    params = (w1, b1, w2, b2)

    out = attention_mechanism(x, params)
    out = jax.block_until_ready(out)

    ref = reference(x, params)
    assert out.shape == (batch, tokens, embed_dim), out.shape
    max_err = float(jnp.max(jnp.abs(out - ref)))
    # bf16 MXU operands + approx reciprocal vs a pure-f32 reference:
    # mixed-precision tolerance.
    assert jnp.allclose(out, ref, atol=2e-2, rtol=2e-2), max_err

    print("KERNEL_OK")
</pallas_src>

<mosaic_0001>
module attributes {stable_mosaic.version = 11 : i64} {
  func.func @_attention_mechanism_kernel(%arg0: i32, %arg1: memref<4x16x128xf32, #tpu.memory_space<vmem>>, %arg2: memref<128x128xbf16, #tpu.memory_space<vmem>>, %arg3: memref<128x128xbf16, #tpu.memory_space<vmem>>, %arg4: memref<2x128xf32, #tpu.memory_space<vmem>>, %arg5: memref<4x16x128xf32, #tpu.memory_space<vmem>>) attributes {dimension_semantics = [#tpu.dimension_semantics<parallel>], iteration_bounds = array<i64: 1>, scalar_prefetch = 0 : i64, scratch_operands = 0 : i64, tpu.core_type = #tpu.core_type<tc>, window_params = [{transform_indices = @transform_0, window_bounds = array<i64: 4, 16, 128>}, {pipeline_mode = #tpu.pipeline_mode<synchronous>, transform_indices = @transform_1, window_bounds = array<i64: 128, 128>}, {pipeline_mode = #tpu.pipeline_mode<synchronous>, transform_indices = @transform_2, window_bounds = array<i64: 128, 128>}, {pipeline_mode = #tpu.pipeline_mode<synchronous>, transform_indices = @transform_3, window_bounds = array<i64: 2, 128>}, {transform_indices = @transform_4, window_bounds = array<i64: 4, 16, 128>}]} {
    %c0 = arith.constant 0 : index
    %c0_0 = arith.constant 0 : index
    %c0_1 = arith.constant 0 : index
    %0 = vector.load %arg1[%c0, %c0_0, %c0_1] : memref<4x16x128xf32, #tpu.memory_space<vmem>>, vector<4x16x128xf32>
    %1 = arith.truncf %0 : vector<4x16x128xf32> to vector<4x16x128xbf16>
    %2 = vector.shape_cast %1 : vector<4x16x128xbf16> to vector<64x128xbf16>
    %c0_2 = arith.constant 0 : index
    %c0_3 = arith.constant 0 : index
    %3 = vector.load %arg4[%c0_2, %c0_3] : memref<2x128xf32, #tpu.memory_space<vmem>>, vector<1x128xf32>
    %c1 = arith.constant 1 : index
    %c0_4 = arith.constant 0 : index
    %4 = vector.load %arg4[%c1, %c0_4] : memref<2x128xf32, #tpu.memory_space<vmem>>, vector<1x128xf32>
    %c0_5 = arith.constant 0 : index
    %c0_6 = arith.constant 0 : index
    %5 = vector.load %arg2[%c0_5, %c0_6] : memref<128x128xbf16, #tpu.memory_space<vmem>>, vector<128x128xbf16>
    %cst = arith.constant dense<0.000000e+00> : vector<64x128xf32>
    %6 = tpu.matmul %2, %5, %cst {dimension_numbers = #tpu.dot_dimension_numbers<[1], [0], [0], [1], [0, 0, 1, 1], [], []>} : vector<64x128xbf16>, vector<128x128xbf16>, vector<64x128xf32> -> vector<64x128xf32>
    %7 = vector.broadcast %3 : vector<1x128xf32> to vector<64x128xf32>
    %8 = arith.addf %6, %7 : vector<64x128xf32>
    %cst_7 = arith.constant 0.000000e+00 : f32
    %9 = vector.broadcast %cst_7 : f32 to vector<64x128xf32>
    %10 = arith.maximumf %8, %9 : vector<64x128xf32>
    %11 = arith.truncf %10 : vector<64x128xf32> to vector<64x128xbf16>
    %c0_8 = arith.constant 0 : index
    %c0_9 = arith.constant 0 : index
    %12 = vector.load %arg3[%c0_8, %c0_9] : memref<128x128xbf16, #tpu.memory_space<vmem>>, vector<128x128xbf16>
    %cst_10 = arith.constant dense<0.000000e+00> : vector<64x128xf32>
    %13 = tpu.matmul %11, %12, %cst_10 {dimension_numbers = #tpu.dot_dimension_numbers<[1], [0], [0], [1], [0, 0, 1, 1], [], []>} : vector<64x128xbf16>, vector<128x128xbf16>, vector<64x128xf32> -> vector<64x128xf32>
    %14 = vector.broadcast %4 : vector<1x128xf32> to vector<64x128xf32>
    %15 = arith.addf %13, %14 : vector<64x128xf32>
    %16 = vector.shape_cast %15 : vector<64x128xf32> to vector<4x16x128xf32>
    %cst_11 = arith.constant dense<0xFF800000> : vector<4x128xf32>
    %17 = vector.multi_reduction <maximumf>, %16, %cst_11 [1] : vector<4x16x128xf32> to vector<4x128xf32>
    %18 = vector.shape_cast %17 : vector<4x128xf32> to vector<4x1x128xf32>
    %19 = vector.broadcast %18 : vector<4x1x128xf32> to vector<4x16x128xf32>
    %20 = arith.subf %16, %19 : vector<4x16x128xf32>
    %21 = math.exp %20 : vector<4x16x128xf32>
    %cst_12 = arith.constant dense<0.000000e+00> : vector<4x128xf32>
    %22 = vector.multi_reduction <add>, %21, %cst_12 [1] : vector<4x16x128xf32> to vector<4x128xf32>
    %23 = vector.shape_cast %22 : vector<4x128xf32> to vector<4x1x128xf32>
    %24 = tpu.reciprocal %23 {approx = true} : vector<4x1x128xf32> -> vector<4x1x128xf32>
    %25 = vector.broadcast %24 : vector<4x1x128xf32> to vector<4x16x128xf32>
    %26 = arith.mulf %21, %25 : vector<4x16x128xf32>
    %c0_13 = arith.constant 0 : index
    %c0_14 = arith.constant 0 : index
    %c0_15 = arith.constant 0 : index
    %27 = vector.load %arg5[%c0_13, %c0_14, %c0_15] : memref<4x16x128xf32, #tpu.memory_space<vmem>>, vector<4x16x128xf32>
    tpu.vector_store %arg5[%c0_13, %c0_14, %c0_15], %26 {strides = array<i32>} : memref<4x16x128xf32, #tpu.memory_space<vmem>>, vector<4x16x128xf32>,
    return
  }
  func.func @transform_0(%arg0: i32) -> (i32, i32, i32) {
    %c0_i32 = arith.constant 0 : i32
    %c0_i32_0 = arith.constant 0 : i32
    %c0_i32_1 = arith.constant 0 : i32
    return %arg0, %c0_i32, %c0_i32_0 : i32, i32, i32
  }
  func.func @transform_1(%arg0: i32) -> (i32, i32) {
    %c0_i32 = arith.constant 0 : i32
    %c0_i32_0 = arith.constant 0 : i32
    %c0_i32_1 = arith.constant 0 : i32
    return %c0_i32, %c0_i32_0 : i32, i32
  }
  func.func @transform_2(%arg0: i32) -> (i32, i32) {
    %c0_i32 = arith.constant 0 : i32
    %c0_i32_0 = arith.constant 0 : i32
    %c0_i32_1 = arith.constant 0 : i32
    return %c0_i32, %c0_i32_0 : i32, i32
  }
  func.func @transform_3(%arg0: i32) -> (i32, i32) {
    %c0_i32 = arith.constant 0 : i32
    %c0_i32_0 = arith.constant 0 : i32
    %c0_i32_1 = arith.constant 0 : i32
    return %c0_i32, %c0_i32_0 : i32, i32
  }
  func.func @transform_4(%arg0: i32) -> (i32, i32, i32) {
    %c0_i32 = arith.constant 0 : i32
    %c0_i32_0 = arith.constant 0 : i32
    %c0_i32_1 = arith.constant 0 : i32
    return %arg0, %c0_i32, %c0_i32_0 : i32, i32, i32
  }
}

</mosaic_0001>

<llo_original>
// kernel: tpu_custom_call.1
$region0: #{tpu_custom_call.1}
  #allocation0 [shape = 'u32[]', space=smem, size = 0x4, offset = 0x4, fixed_abs, tag = 'smem constant byte address 0x4 - core index']
  #allocation1 [shape = 'u32[144,128]{1,0:T(1,128)}', space=vmem, size = 0x12000, scoped, tag = 'internal scratch']
  %s0 = inlined_call_operand.hbm [shape: f32[4,16,128], index: 0, kind: input, shape index: {}]
  %s1 = inlined_call_operand.hbm [shape: bf16[128,128], index: 1, kind: input, shape index: {}]
  %s2 = inlined_call_operand.hbm [shape: bf16[128,128], index: 2, kind: input, shape index: {}]
  %s3 = inlined_call_operand.vmem [shape: f32[2,128], index: 3, kind: input, shape index: {}]
  %s4 = inlined_call_operand.hbm [shape: f32[4,16,128], index: 4, kind: output, shape index: {}]
  %s5 = sld [smem:[#allocation0]]
  $region38: #{tpu_custom_call.1} parent=0
    _
  %s7 = ssub.s32 1, %s5
  %s8 = scalar_select 0, %s7, %s5
  $region1: #{tpu_custom_call.1} parent=0
    #allocation2 [shape = 'u8[32768]{0}', space=vmem, size = 0x8000, scoped, tag = 'input window, operand 0, single buffered']
    #allocation3 [shape = 's32[1]{0}', space=sflag, size = 0x4, scoped, tag = 'scoped memory for tpu_custom_call.1']
    #allocation4 [shape = 's32[1]{0}', space=sflag, size = 0x4, scoped, tag = 'scoped memory for tpu_custom_call.1']
    #allocation5 [shape = 'u8[32768]{0}', space=vmem, size = 0x8000, scoped, tag = 'input window, operand 1, single buffered']
    #allocation6 [shape = 's32[1]{0}', space=sflag, size = 0x4, scoped, tag = 'scoped memory for tpu_custom_call.1']
    #allocation7 [shape = 'u8[32768]{0}', space=vmem, size = 0x8000, scoped, tag = 'input window, operand 2, single buffered']
    #allocation8 [shape = 'u8[32768]{0}', space=vmem, size = 0x8000, scoped, tag = 'output window, operand 0, single buffered']
    %9 = vsyncpa [#allocation3], 0
    %10 = vsyncpa [#allocation6], 0
    %11 = vsyncpa [#allocation4], 0
    // Predicated region
    $region2: #{tpu_custom_call.1} parent=1 // pred_check
      _
    $region3: #{tpu_custom_call.1} parent=1 // pred_check_branch
      %13 = sbr.rel (0) target = $region5
    $region4: #{tpu_custom_call.1} parent=1 // pred_region
      %s15 = ssub.s32 1024, 1024
      %16 = vsyncadd [#allocation3], %s15
      %s17 = sshll.u32 [#allocation2], 4
      %s18 = int_to_ptr.vmem [resolvable:$true] %s17
      %23 = dma.hbm_to_vmem [thread:$0]  %s0, 1024, %s18, [#allocation3], 128, 128, 8
    $region5: #{tpu_custom_call.1} parent=1 // pred_fallthru
      _
    // Predicated region
    $region6: #{tpu_custom_call.1} parent=1 // pred_check
      _
    $region7: #{tpu_custom_call.1} parent=1 // pred_check_branch
      %25 = sbr.rel (0) target = $region9
    $region8: #{tpu_custom_call.1} parent=1 // pred_region
      %s27 = ssub.s32 1024, 1024
      %28 = vsyncadd [#allocation6], %s27
      %s29 = sshll.u32 [#allocation5], 4
      %s30 = int_to_ptr.vmem [resolvable:$true] %s29
      %35 = dma.hbm_to_vmem [thread:$0]  %s1, 1024, %s30, [#allocation6], 64, 64, 4
    $region9: #{tpu_custom_call.1} parent=1 // pred_fallthru
      _
    // Predicated region
    $region10: #{tpu_custom_call.1} parent=1 // pred_check
      _
    $region11: #{tpu_custom_call.1} parent=1 // pred_check_branch
      %37 = sbr.rel (0) target = $region13
    $region12: #{tpu_custom_call.1} parent=1 // pred_region
      %s39 = ssub.s32 1024, 1024
      %40 = vsyncadd [#allocation6], %s39
      %s41 = sshll.u32 [#allocation7], 4
      %s42 = int_to_ptr.vmem [resolvable:$true] %s41
      %47 = dma.hbm_to_vmem [thread:$0]  %s2, 1024, %s42, [#allocation6], 64, 64, 4
    $region13: #{tpu_custom_call.1} parent=1 // pred_fallthru
      _
    // Predicated region
    $region14: #{tpu_custom_call.1} parent=1 // pred_check
      _
    $region15: #{tpu_custom_call.1} parent=1 // pred_check_branch
      %49 = sbr.rel (0) target = $region17
    $region16: #{tpu_custom_call.1} parent=1 // pred_region
      _
    $region17: #{tpu_custom_call.1} parent=1 // pred_fallthru
      _
    // Predicated region
    $region18: #{tpu_custom_call.1} parent=1 // pred_check
      _
    $region19: #{tpu_custom_call.1} parent=1 // pred_check_branch
      %51 = sbr.rel (0) target = $region21
    $region20: #{tpu_custom_call.1} parent=1 // pred_region
      %52 = dma.done [#allocation3], 1024
    $region21: #{tpu_custom_call.1} parent=1 // pred_fallthru
      _
    // Predicated region
    $region22: #{tpu_custom_call.1} parent=1 // pred_check
      _
    $region23: #{tpu_custom_call.1} parent=1 // pred_check_branch
      %54 = sbr.rel (0) target = $region25
    $region24: #{tpu_custom_call.1} parent=1 // pred_region
      %55 = dma.done [#allocation6], 1024
    $region25: #{tpu_custom_call.1} parent=1 // pred_fallthru
      _
    // Predicated region
    $region26: #{tpu_custom_call.1} parent=1 // pred_check
      _
    $region27: #{tpu_custom_call.1} parent=1 // pred_check_branch
      %57 = sbr.rel (0) target = $region29
    $region28: #{tpu_custom_call.1} parent=1 // pred_region
      %58 = dma.done [#allocation6], 1024
    $region29: #{tpu_custom_call.1} parent=1 // pred_fallthru
      _
    %v60 = vld [vmem:[#allocation2] sm:$0xff]
    %v61 = vld [vmem:[#allocation2 + $0x8] sm:$0xff]
    %v62 = vld [vmem:[#allocation2 + $0x10] sm:$0xff]
    %v63 = vld [vmem:[#allocation2 + $0x18] sm:$0xff]
    %v64 = vld [vmem:[#allocation2 + $0x20] sm:$0xff]
    %v65 = vld [vmem:[#allocation2 + $0x28] sm:$0xff]
    %v66 = vld [vmem:[#allocation2 + $0x30] sm:$0xff]
    %v67 = vld [vmem:[#allocation2 + $0x38] sm:$0xff]
    %v68 = vpack.c.bf16 %v61, %v60
    %v69 = vpack.c.bf16 %v63, %v62
    %v70 = vpack.c.bf16 %v65, %v64
    %v71 = vpack.c.bf16 %v67, %v66
    %v72 = vld [vmem:[%s3] sm:$0x1]
    %v73 = vld [vmem:[%s3 + $0x1] sm:$0x1]
    %v74 = vld [vmem:[#allocation5] sm:$0xf]
    %v75 = vld [vmem:[#allocation5 + $0x4] sm:$0xf]
    %v76 = vld [vmem:[#allocation5 + $0x8] sm:$0xf]
    %v77 = vld [vmem:[#allocation5 + $0xc] sm:$0xf]
    %v78 = vld [vmem:[#allocation5 + $0x10] sm:$0xf]
    %v79 = vld [vmem:[#allocation5 + $0x14] sm:$0xf]
    %v80 = vld [vmem:[#allocation5 + $0x18] sm:$0xf]
    %v81 = vld [vmem:[#allocation5 + $0x1c] sm:$0xf]
    %v82 = vld [vmem:[#allocation5 + $0x20] sm:$0xf]
    %v83 = vld [vmem:[#allocation5 + $0x24] sm:$0xf]
    %v84 = vld [vmem:[#allocation5 + $0x28] sm:$0xf]
    %v85 = vld [vmem:[#allocation5 + $0x2c] sm:$0xf]
    %v86 = vld [vmem:[#allocation5 + $0x30] sm:$0xf]
    %v87 = vld [vmem:[#allocation5 + $0x34] sm:$0xf]
    %v88 = vld [vmem:[#allocation5 + $0x38] sm:$0xf]
    %v89 = vld [vmem:[#allocation5 + $0x3c] sm:$0xf]
    %v90 = vlaneseq
    %v91 = vshrl.u32 %v90, 7
    %v92 = vsub.s32 0, %v91
    %v93 = vrot.slane %v72, %v92
    %v110 = vunpack.c.l.b16 %v74
    %v111 = vunpack.c.l.b16 %v75
    %v112 = vunpack.c.l.b16 %v76
    %v113 = vunpack.c.l.b16 %v77
    %v114 = vunpack.c.l.b16 %v78
    %v115 = vunpack.c.l.b16 %v79
    %v116 = vunpack.c.l.b16 %v80
    %v117 = vunpack.c.l.b16 %v81
    %v118 = vunpack.c.l.b16 %v82
    %v119 = vunpack.c.l.b16 %v83
    %v120 = vunpack.c.l.b16 %v84
    %v121 = vunpack.c.l.b16 %v85
    %v122 = vunpack.c.l.b16 %v86
    %v123 = vunpack.c.l.b16 %v87
    %v124 = vunpack.c.l.b16 %v88
    %v125 = vunpack.c.l.b16 %v89
    %v126 = vpack.c.b16 %v111, %v110
    %v127 = vpack.c.b16 %v113, %v112
    %v128 = vpack.c.b16 %v115, %v114
    %v129 = vpack.c.b16 %v117, %v116
    %v130 = vpack.c.b16 %v119, %v118
    %v131 = vpack.c.b16 %v121, %v120
    %v132 = vpack.c.b16 %v123, %v122
    %v133 = vpack.c.b16 %v125, %v124
    %142 = vmatprep.subr.bf16.mxu0 0
    %143 = vmatpush1.bf16.msra.mxu0 %v126
    %144 = vmatprep.subr.bf16.mxu0 0
    %145 = vmatpush1.bf16.msra.mxu0 %v127
    %146 = vmatprep.subr.bf16.mxu0 0
    %147 = vmatpush1.bf16.msra.mxu0 %v128
    %148 = vmatprep.subr.bf16.mxu0 0
    %149 = vmatpush1.bf16.msra.mxu0 %v129
    %150 = vmatprep.subr.bf16.mxu0 0
    %151 = vmatpush1.bf16.msra.mxu0 %v130
    %152 = vmatprep.subr.bf16.mxu0 0
    %153 = vmatpush1.bf16.msra.mxu0 %v131
    %154 = vmatprep.subr.bf16.mxu0 0
    %155 = vmatpush1.bf16.msra.mxu0 %v132
    %156 = vmatprep.subr.bf16.mxu0 0
    %157 = vmatpush1.bf16.msra.mxu0 %v133
    %158 = vmatprep.subr.bf16.mxu0 0
    %159 = vmatpush1.bf16.msra.mxu0 0
    %160 = vmatprep.subr.bf16.mxu0 0
    %161 = vmatpush1.bf16.msra.mxu0 0
    %162 = vmatprep.subr.bf16.mxu0 0
    %163 = vmatpush1.bf16.msra.mxu0 0
    %164 = vmatprep.subr.bf16.mxu0 0
    %165 = vmatpush1.bf16.msra.mxu0 0
    %166 = vmatprep.subr.bf16.mxu0 0
    %167 = vmatpush1.bf16.msra.mxu0 0
    %168 = vmatprep.subr.bf16.mxu0 0
    %169 = vmatpush1.bf16.msra.mxu0 0
    %170 = vmatprep.subr.bf16.mxu0 0
    %171 = vmatpush1.bf16.msra.mxu0 0
    %172 = vmatprep.subr.bf16.mxu0 0
    %173 = vmatpush1.bf16.msra.mxu0 0
    %174 = vmatprep.mubr.bf16.mxu0 0
    %175 = vmatmul.mubr.bf16.gmra.mrb[0].mxu0 %v68
    %v176 = vpop.f32.mrb[0].mxu0
    %v177 = vadd.f32 %v93, %v176
    %v178 = vpop.f32.mrb[0].mxu0
    %v179 = vpop.f32.mrb[0].mxu0
    %v180 = vadd.f32 %v93, %v179
    %v181 = vpop.f32.mrb[0].mxu0
    %182 = vmatprep.mubr.bf16.mxu0 0
    %183 = vmatmul.mubr.bf16.gmra.mrb[0].mxu0 %v69
    %v184 = vpop.f32.mrb[0].mxu0
    %v185 = vadd.f32 %v93, %v184
    %v186 = vpop.f32.mrb[0].mxu0
    %v187 = vpop.f32.mrb[0].mxu0
    %v188 = vadd.f32 %v93, %v187
    %v189 = vpop.f32.mrb[0].mxu0
    %190 = vmatprep.mubr.bf16.mxu0 0
    %191 = vmatmul.mubr.bf16.gmra.mrb[0].mxu0 %v70
    %v192 = vpop.f32.mrb[0].mxu0
    %v193 = vadd.f32 %v93, %v192
    %v194 = vpop.f32.mrb[0].mxu0
    %v195 = vpop.f32.mrb[0].mxu0
    %v196 = vadd.f32 %v93, %v195
    %v197 = vpop.f32.mrb[0].mxu0
    %198 = vmatprep.mubr.bf16.mxu0 0
    %199 = vmatmul.mubr.bf16.gmra.mrb[0].mxu0 %v71
    %v200 = vpop.f32.mrb[0].mxu0
    %v201 = vadd.f32 %v93, %v200
    %v202 = vpop.f32.mrb[0].mxu0
    %v203 = vpop.f32.mrb[0].mxu0
    %v204 = vadd.f32 %v93, %v203
    %v205 = vpop.f32.mrb[0].mxu0
    %206 = vdwg.mxu0
    %v207 = vmax.f32 %v177, 0.0
    %v208 = vmax.f32 %v180, 0.0
    %v209 = vmax.f32 %v185, 0.0
    %v210 = vmax.f32 %v188, 0.0
    %v211 = vmax.f32 %v193, 0.0
    %v212 = vmax.f32 %v196, 0.0
    %v213 = vmax.f32 %v201, 0.0
    %v214 = vmax.f32 %v204, 0.0
    %v215 = vpack.c.bf16 %v208, %v207
    %v216 = vpack.c.bf16 %v210, %v209
    %v217 = vpack.c.bf16 %v212, %v211
    %v218 = vpack.c.bf16 %v214, %v213
    %v219 = vld [vmem:[#allocation7] sm:$0xf]
    %v220 = vld [vmem:[#allocation7 + $0x4] sm:$0xf]
    %v221 = vld [vmem:[#allocation7 + $0x8] sm:$0xf]
    %v222 = vld [vmem:[#allocation7 + $0xc] sm:$0xf]
    %v223 = vld [vmem:[#allocation7 + $0x10] sm:$0xf]
    %v224 = vld [vmem:[#allocation7 + $0x14] sm:$0xf]
    %v225 = vld [vmem:[#allocation7 + $0x18] sm:$0xf]
    %v226 = vld [vmem:[#allocation7 + $0x1c] sm:$0xf]
    %v227 = vld [vmem:[#allocation7 + $0x20] sm:$0xf]
    %v228 = vld [vmem:[#allocation7 + $0x24] sm:$0xf]
    %v229 = vld [vmem:[#allocation7 + $0x28] sm:$0xf]
    %v230 = vld [vmem:[#allocation7 + $0x2c] sm:$0xf]
    %v231 = vld [vmem:[#allocation7 + $0x30] sm:$0xf]
    %v232 = vld [vmem:[#allocation7 + $0x34] sm:$0xf]
    %v233 = vld [vmem:[#allocation7 + $0x38] sm:$0xf]
    %v234 = vld [vmem:[#allocation7 + $0x3c] sm:$0xf]
    %v235 = vlaneseq
    %v236 = vshrl.u32 %v235, 7
    %v237 = vsub.s32 0, %v236
    %v238 = vrot.slane %v73, %v237
    %v255 = vunpack.c.l.b16 %v219
    %v256 = vunpack.c.l.b16 %v220
    %v257 = vunpack.c.l.b16 %v221
    %v258 = vunpack.c.l.b16 %v222
    %v259 = vunpack.c.l.b16 %v223
    %v260 = vunpack.c.l.b16 %v224
    %v261 = vunpack.c.l.b16 %v225
    %v262 = vunpack.c.l.b16 %v226
    %v263 = vunpack.c.l.b16 %v227
    %v264 = vunpack.c.l.b16 %v228
    %v265 = vunpack.c.l.b16 %v229
    %v266 = vunpack.c.l.b16 %v230
    %v267 = vunpack.c.l.b16 %v231
    %v268 = vunpack.c.l.b16 %v232
    %v269 = vunpack.c.l.b16 %v233
    %v270 = vunpack.c.l.b16 %v234
    %v271 = vpack.c.b16 %v256, %v255
    %v272 = vpack.c.b16 %v258, %v257
    %v273 = vpack.c.b16 %v260, %v259
    %v274 = vpack.c.b16 %v262, %v261
    %v275 = vpack.c.b16 %v264, %v263
    %v276 = vpack.c.b16 %v266, %v265
    %v277 = vpack.c.b16 %v268, %v267
    %v278 = vpack.c.b16 %v270, %v269
    %287 = vmatprep.subr.bf16.mxu0 0
    %288 = vmatpush1.bf16.msra.mxu0 %v271
    %289 = vmatprep.subr.bf16.mxu0 0
    %290 = vmatpush1.bf16.msra.mxu0 %v272
    %291 = vmatprep.subr.bf16.mxu0 0
    %292 = vmatpush1.bf16.msra.mxu0 %v273
    %293 = vmatprep.subr.bf16.mxu0 0
    %294 = vmatpush1.bf16.msra.mxu0 %v274
    %295 = vmatprep.subr.bf16.mxu0 0
    %296 = vmatpush1.bf16.msra.mxu0 %v275
    %297 = vmatprep.subr.bf16.mxu0 0
    %298 = vmatpush1.bf16.msra.mxu0 %v276
    %299 = vmatprep.subr.bf16.mxu0 0
    %300 = vmatpush1.bf16.msra.mxu0 %v277
    %301 = vmatprep.subr.bf16.mxu0 0
    %302 = vmatpush1.bf16.msra.mxu0 %v278
    %303 = vmatprep.subr.bf16.mxu0 0
    %304 = vmatpush1.bf16.msra.mxu0 0
    %305 = vmatprep.subr.bf16.mxu0 0
    %306 = vmatpush1.bf16.msra.mxu0 0
    %307 = vmatprep.subr.bf16.mxu0 0
    %308 = vmatpush1.bf16.msra.mxu0 0
    %309 = vmatprep.subr.bf16.mxu0 0
    %310 = vmatpush1.bf16.msra.mxu0 0
    %311 = vmatprep.subr.bf16.mxu0 0
    %312 = vmatpush1.bf16.msra.mxu0 0
    %313 = vmatprep.subr.bf16.mxu0 0
    %314 = vmatpush1.bf16.msra.mxu0 0
    %315 = vmatprep.subr.bf16.mxu0 0
    %316 = vmatpush1.bf16.msra.mxu0 0
    %317 = vmatprep.subr.bf16.mxu0 0
    %318 = vmatpush1.bf16.msra.mxu0 0
    %319 = vmatprep.mubr.bf16.mxu0 0
    %320 = vmatmul.mubr.bf16.gmra.mrb[0].mxu0 %v215
    %v321 = vpop.f32.mrb[0].mxu0
    %v322 = vadd.f32 %v238, %v321
    %v323 = vpop.f32.mrb[0].mxu0
    %v324 = vpop.f32.mrb[0].mxu0
    %v325 = vadd.f32 %v238, %v324
    %v326 = vpop.f32.mrb[0].mxu0
    %327 = vmatprep.mubr.bf16.mxu0 0
    %328 = vmatmul.mubr.bf16.gmra.mrb[0].mxu0 %v216
    %v329 = vpop.f32.mrb[0].mxu0
    %v330 = vadd.f32 %v238, %v329
    %v331 = vpop.f32.mrb[0].mxu0
    %v332 = vpop.f32.mrb[0].mxu0
    %v333 = vadd.f32 %v238, %v332
    %v334 = vpop.f32.mrb[0].mxu0
    %335 = vmatprep.mubr.bf16.mxu0 0
    %336 = vmatmul.mubr.bf16.gmra.mrb[0].mxu0 %v217
    %v337 = vpop.f32.mrb[0].mxu0
    %v338 = vadd.f32 %v238, %v337
    %v339 = vpop.f32.mrb[0].mxu0
    %v340 = vpop.f32.mrb[0].mxu0
    %v341 = vadd.f32 %v238, %v340
    %v342 = vpop.f32.mrb[0].mxu0
    %343 = vmatprep.mubr.bf16.mxu0 0
    %344 = vmatmul.mubr.bf16.gmra.mrb[0].mxu0 %v218
    %v345 = vpop.f32.mrb[0].mxu0
    %v346 = vadd.f32 %v238, %v345
    %v347 = vpop.f32.mrb[0].mxu0
    %v348 = vpop.f32.mrb[0].mxu0
    %v349 = vadd.f32 %v238, %v348
    %v350 = vpop.f32.mrb[0].mxu0
    %351 = vdwg.mxu0
    %v352 = vmax.f32 %v322, %v325
    %v353 = vrot.slane %v352, 4
    %v354 = vmax.f32 %v352, %v353
    %v355 = vrot.slane %v354, 2
    %v356 = vmax.f32 %v354, %v355
    %v357 = vrot.slane %v356, 1
    %v358 = vmax.f32 %v356, %v357
    %v359 = vmax.f32 %v330, %v333
    %v360 = vrot.slane %v359, 4
    %v361 = vmax.f32 %v359, %v360
    %v362 = vrot.slane %v361, 2
    %v363 = vmax.f32 %v361, %v362
    %v364 = vrot.slane %v363, 1
    %v365 = vmax.f32 %v363, %v364
    %v366 = vmax.f32 %v338, %v341
    %v367 = vrot.slane %v366, 4
    %v368 = vmax.f32 %v366, %v367
    %v369 = vrot.slane %v368, 2
    %v370 = vmax.f32 %v368, %v369
    %v371 = vrot.slane %v370, 1
    %v372 = vmax.f32 %v370, %v371
    %v373 = vmax.f32 %v346, %v349
    %v374 = vrot.slane %v373, 4
    %v375 = vmax.f32 %v373, %v374
    %v376 = vrot.slane %v375, 2
    %v377 = vmax.f32 %v375, %v376
    %v378 = vrot.slane %v377, 1
    %v379 = vmax.f32 %v377, %v378
    %v380 = vsub.f32 %v322, %v358
    %v381 = vsub.f32 %v325, %v358
    %v382 = vsub.f32 %v330, %v365
    %v383 = vsub.f32 %v333, %v365
    %v384 = vsub.f32 %v338, %v372
    %v385 = vsub.f32 %v341, %v372
    %v386 = vsub.f32 %v346, %v379
    %v387 = vsub.f32 %v349, %v379
    %v388 = vmul.f32 %v380, 1.442695
    %v389 = vpow.pop %v388
    %v390 = vmul.f32 %v381, 1.442695
    %v391 = vpow.pop %v390
    %v392 = vmul.f32 %v382, 1.442695
    %v393 = vpow.pop %v392
    %v394 = vmul.f32 %v383, 1.442695
    %v395 = vpow.pop %v394
    %v396 = vmul.f32 %v384, 1.442695
    %v397 = vpow.pop %v396
    %v398 = vmul.f32 %v385, 1.442695
    %v399 = vpow.pop %v398
    %v400 = vmul.f32 %v386, 1.442695
    %v401 = vpow.pop %v400
    %v402 = vmul.f32 %v387, 1.442695
    %v403 = vpow.pop %v402
    %v404 = vadd.f32 %v389, %v391
    %v405 = vrot.slane %v404, 4
    %v406 = vadd.f32 %v404, %v405
    %v407 = vrot.slane %v406, 2
    %v408 = vadd.f32 %v406, %v407
    %v409 = vrot.slane %v408, 1
    %v410 = vadd.f32 %v408, %v409
    %v411 = vadd.f32 %v393, %v395
    %v412 = vrot.slane %v411, 4
    %v413 = vadd.f32 %v411, %v412
    %v414 = vrot.slane %v413, 2
    %v415 = vadd.f32 %v413, %v414
    %v416 = vrot.slane %v415, 1
    %v417 = vadd.f32 %v415, %v416
    %v418 = vadd.f32 %v397, %v399
    %v419 = vrot.slane %v418, 4
    %v420 = vadd.f32 %v418, %v419
    %v421 = vrot.slane %v420, 2
    %v422 = vadd.f32 %v420, %v421
    %v423 = vrot.slane %v422, 1
    %v424 = vadd.f32 %v422, %v423
    %v425 = vadd.f32 %v401, %v403
    %v426 = vrot.slane %v425, 4
    %v427 = vadd.f32 %v425, %v426
    %v428 = vrot.slane %v427, 2
    %v429 = vadd.f32 %v427, %v428
    %v430 = vrot.slane %v429, 1
    %v431 = vadd.f32 %v429, %v430
    %v432 = vrcp.pop %v410
    %v433 = vrcp.pop %v417
    %v434 = vrcp.pop %v424
    %v435 = vrcp.pop %v431
    %v436 = vmul.f32 %v389, %v432
    %v437 = vmul.f32 %v391, %v432
    %v438 = vmul.f32 %v393, %v433
    %v439 = vmul.f32 %v395, %v433
    %v440 = vmul.f32 %v397, %v434
    %v441 = vmul.f32 %v399, %v434
    %v442 = vmul.f32 %v401, %v435
    %v443 = vmul.f32 %v403, %v435
    %444 = vst [vmem:[#allocation8] sm:$0xff] %v436
    %445 = vst [vmem:[#allocation8 + $0x8] sm:$0xff] %v437
    %446 = vst [vmem:[#allocation8 + $0x10] sm:$0xff] %v438
    %447 = vst [vmem:[#allocation8 + $0x18] sm:$0xff] %v439
    %448 = vst [vmem:[#allocation8 + $0x20] sm:$0xff] %v440
    %449 = vst [vmem:[#allocation8 + $0x28] sm:$0xff] %v441
    %450 = vst [vmem:[#allocation8 + $0x30] sm:$0xff] %v442
    %451 = vst [vmem:[#allocation8 + $0x38] sm:$0xff] %v443
    // Predicated region
    $region30: #{tpu_custom_call.1} parent=1 // pred_check
      _
    $region31: #{tpu_custom_call.1} parent=1 // pred_check_branch
      %453 = sbr.rel (0) target = $region33
    $region32: #{tpu_custom_call.1} parent=1 // pred_region
      %s455 = ssub.s32 1024, 1024
      %456 = vsyncadd [#allocation4], %s455
      %s457 = sshll.u32 [#allocation8], 4
      %s458 = int_to_ptr.vmem [resolvable:$true] %s457
      %463 = dma.vmem_to_hbm [thread:$0]  %s458, 1024, %s4, [#allocation4], 128, 128, 8
    $region33: #{tpu_custom_call.1} parent=1 // pred_fallthru
      _
    // Predicated region
    $region34: #{tpu_custom_call.1} parent=1 // pred_check
      _
    $region35: #{tpu_custom_call.1} parent=1 // pred_check_branch
      %465 = sbr.rel (0) target = $region37
    $region36: #{tpu_custom_call.1} parent=1 // pred_region
      %466 = dma.done [#allocation4], 1024
    $region37: #{tpu_custom_call.1} parent=1 // pred_fallthru
      _
    %467 = vsyncpa [#allocation3], 1
    %468 = vsyncpa [#allocation6], 1
    %469 = vsyncpa [#allocation4], 1

</llo_original>
